<compile_context>
chip_gen: v7x
topology: tpu7x:2x2x1
jax: 0.10.0
libtpu: 0.0.40
codegen_flags: <defaults>
</compile_context>

<pallas_src>
import math

import jax
import jax.numpy as jnp
from jax import lax
from jax.experimental import pallas as pl
from jax.experimental.pallas import tpu as pltpu


# --------------------------------------------------------------------------- kernels
def _make_energy_kernel(beta_a: float, num_patterns: int):
    """Energy-only variant. x_ref already holds beta * x_n (beta folded in wrapper)."""
    log_m = math.log(num_patterns)

    def kernel(x_ref, at_ref, energy_ref, m_sc, l_sc):
        j = pl.program_id(1)

        @pl.when(j == 0)
        def _init():
            m_sc[...] = jnp.full_like(m_sc, -jnp.inf)
            l_sc[...] = jnp.zeros_like(l_sc)

        # MXU-native matmul: x [tn, F] @ a_T [F, tm] -> s = beta * attn  [tn, tm].
        s = lax.dot_general(
            x_ref[...], at_ref[...],
            dimension_numbers=(((1,), (0,)), ((), ())),
            preferred_element_type=jnp.float32)

        # Online logsumexp over the stored-pattern (M) axis.
        m_new = jnp.maximum(m_sc[...], jnp.max(s, axis=-1, keepdims=True))
        alpha = jnp.exp(m_sc[...] - m_new)
        l_sc[...] = alpha * l_sc[...] + jnp.sum(jnp.exp(s - m_new), axis=-1,
                                                keepdims=True)
        m_sc[...] = m_new

        @pl.when(j == pl.num_programs(1) - 1)
        def _finalize():
            lse = m_sc[...] + jnp.log(l_sc[...])          # = logsumexp(beta*attn)
            energy_ref[...] = (-(lse - log_m) / beta_a).astype(energy_ref.dtype)

    return kernel


def _make_attn_kernel(beta_a: float, num_patterns: int):
    """Variant that also writes the unique attn half attn[:, :M]."""
    log_m = math.log(num_patterns)

    def kernel(x_ref, at_ref, energy_ref, attn_ref, m_sc, l_sc):
        j = pl.program_id(1)

        @pl.when(j == 0)
        def _init():
            m_sc[...] = jnp.full_like(m_sc, -jnp.inf)
            l_sc[...] = jnp.zeros_like(l_sc)

        attn = lax.dot_general(
            x_ref[...], at_ref[...],
            dimension_numbers=(((1,), (0,)), ((), ())),
            preferred_element_type=jnp.float32)           # [tn, tm]
        attn_ref[...] = attn.astype(attn_ref.dtype)

        s = beta_a * attn
        m_new = jnp.maximum(m_sc[...], jnp.max(s, axis=-1, keepdims=True))
        alpha = jnp.exp(m_sc[...] - m_new)
        l_sc[...] = alpha * l_sc[...] + jnp.sum(jnp.exp(s - m_new), axis=-1,
                                                keepdims=True)
        m_sc[...] = m_new

        @pl.when(j == pl.num_programs(1) - 1)
        def _finalize():
            lse = m_sc[...] + jnp.log(l_sc[...])
            energy_ref[...] = (-(lse - log_m) / beta_a).astype(energy_ref.dtype)

    return kernel


# --------------------------------------------------------------------------- helpers
def _pick_tile(dim: int, target: int, align: int) -> int:
    """Largest divisor of `dim` <= target, preferring `align`-multiples, else full."""
    if dim <= target:
        return dim
    for al in (align, 8, 1):
        t = (target // al) * al
        while t >= al:
            if dim % t == 0:
                return t
            t -= al
    return dim  # no divisor found -> whole (untiled) dim


def _pad(v: int, mult: int) -> int:
    return -(-v // mult) * mult


def _f32_normalize(v):
    """torch F.normalize(dim=-1) semantics, computed in f32."""
    v32 = v.astype(jnp.float32)
    nrm = jnp.sqrt(jnp.sum(v32 * v32, axis=-1, keepdims=True))
    return v32 / jnp.maximum(nrm, 1e-12)


def _vmem_limit_bytes(vmem_est: int) -> int:
    try:
        info = pltpu.get_tpu_info()
        phys = int(getattr(info, "vmem_capacity_bytes", 64 << 20))
    except Exception:  # interpret mode / query unavailable -> assume smallest (v7x)
        phys = 64 << 20
    cap = min(phys - (8 << 20), 100 << 20)     # leave headroom for Mosaic scratch
    want = int(1.25 * vmem_est) + (2 << 20)
    return max(min(want, cap), min(32 << 20, cap))


# --------------------------------------------------------------------------- wrapper
def hopfield_energy(x, a, beta_a, normalize=True, *, return_attn=False,
                    mask_diagonale=False, tile_n=1024, tile_m=2048, mxu_dtype=None):
    """HopfieldEnergy.forward. Returns energy [N] (and attn [N, 2M] if requested)."""
    if mask_diagonale:
        # TODO(synk): mask_diagonale=True path (diagonal := -inf) not implemented.
        raise NotImplementedError("mask_diagonale=True is not supported")

    assert x.ndim == 2 and a.ndim == 2 and x.shape[-1] == a.shape[-1]
    n, f = x.shape
    m = a.shape[0]
    beta_a = float(beta_a)

    # __init__ / forward normalization in f32 (matches torch F.normalize numerics).
    if normalize:
        a_n = _f32_normalize(a)
        x_n = _f32_normalize(x)
    else:
        a_n = a.astype(jnp.float32)
        x_n = x.astype(jnp.float32)

    # Constants of the forward pass, hoisted out of the kernel.
    half_maxnorm_sq = 0.5 * jnp.max(jnp.sum(a_n * a_n, axis=-1))      # scalar
    half_xx = 0.5 * jnp.sum(x_n * x_n, axis=-1)                       # [N]

    compute_dtype = jnp.dtype(x.dtype if mxu_dtype is None else mxu_dtype)
    a_t = a_n.T.astype(compute_dtype)                                 # [F, M] lane-dense in M

    # ---- tile selection ------------------------------------------------------
    # Aim for >= 2 N tiles on large N so the "parallel" axis megacore-shards (v7x),
    # and align tn to 128 (MXU rows) where a divisor exists.
    tn_target = tile_n if n < 256 else min(tile_n, max(128, n // 2))
    tn = _pick_tile(n, tn_target, 128)
    tm = _pick_tile(m, tile_m, 128)
    grid = (n // tn, m // tm)

    # ---- padding-aware VMEM budget -------------------------------------------
    isz = compute_dtype.itemsize
    x_bytes = _pad(tn, 8) * _pad(f, 128) * isz
    a_bytes = _pad(f, 8) * _pad(tm, 128) * isz
    e_bytes = _pad(tn, 8) * 128 * 4                       # (tn, 1) f32 block -> 128 lanes
    sc_bytes = 2 * _pad(tn, 8) * 128 * 4                  # m_sc, l_sc
    attn_bytes = (_pad(tn, 8) * _pad(tm, 128) * compute_dtype.itemsize
                  if return_attn else 0)
    vmem_est = 2 * (x_bytes + a_bytes + e_bytes + attn_bytes) + sc_bytes
    vmem_limit = _vmem_limit_bytes(vmem_est)

    dim_sem = ("parallel", "arbitrary")
    energy_shape = jax.ShapeDtypeStruct((n, 1), jnp.float32)
    x_spec = pl.BlockSpec((tn, f), lambda i, j: (i, 0))       # revisited across j
    at_spec = pl.BlockSpec((f, tm), lambda i, j: (0, j))      # streamed over M
    energy_spec = pl.BlockSpec((tn, 1), lambda i, j: (i, 0))  # accumulator-resident
    scratch = [pltpu.VMEM((tn, 1), jnp.float32),              # online-LSE running max
               pltpu.VMEM((tn, 1), jnp.float32)]              # online-LSE running sum

    if return_attn:
        kernel = _make_attn_kernel(beta_a, m)
        energy, attn_a = pl.pallas_call(
            kernel,
            out_shape=(energy_shape,
                       jax.ShapeDtypeStruct((n, m), compute_dtype)),
            grid_spec=pltpu.PrefetchScalarGridSpec(
                num_scalar_prefetch=0,
                grid=grid,
                in_specs=[x_spec, at_spec],
                out_specs=(energy_spec,
                           pl.BlockSpec((tn, tm), lambda i, j: (i, j))),
                scratch_shapes=scratch,
            ),
            compiler_params=pltpu.CompilerParams(
                dimension_semantics=dim_sem,
                vmem_limit_bytes=vmem_limit,
            ),
        )(x_n.astype(compute_dtype), a_t)
    else:
        # Fold beta into x so the kernel's dot produces beta*attn directly.
        kernel = _make_energy_kernel(beta_a, m)
        energy = pl.pallas_call(
            kernel,
            out_shape=energy_shape,
            grid_spec=pltpu.PrefetchScalarGridSpec(
                num_scalar_prefetch=0,
                grid=grid,
                in_specs=[x_spec, at_spec],
                out_specs=energy_spec,
                scratch_shapes=scratch,
            ),
            compiler_params=pltpu.CompilerParams(
                dimension_semantics=dim_sem,
                vmem_limit_bytes=vmem_limit,
            ),
        )((beta_a * x_n).astype(compute_dtype), a_t)
        attn_a = None

    energy = energy[:, 0] + half_xx + half_maxnorm_sq
    if return_attn:
        # concat([a, a]) duplicates the stored patterns -> the two attn halves are
        # identical; assemble the full [N, 2M] result outside the kernel.
        return energy, jnp.concatenate([attn_a, attn_a], axis=-1)
    return energy


# --------------------------------------------------------------------------- reference
def _reference(x, a, beta_a, normalize=True):
    """Pure-JAX reference mirroring the PyTorch module."""
    if normalize:
        a = a / jnp.maximum(jnp.linalg.norm(a, axis=-1, keepdims=True), 1e-12)
        x = x / jnp.maximum(jnp.linalg.norm(x, axis=-1, keepdims=True), 1e-12)
    mem = jnp.concatenate([a, a], axis=0)
    attn = jnp.einsum("if,jf->ij", x, mem)
    m = a.shape[0]
    lse = jax.scipy.special.logsumexp(beta_a * attn[:, :m], axis=-1)
    a_energy = -(lse - math.log(m)) / beta_a
    maxnorm = jnp.max(jnp.linalg.norm(a, axis=-1))
    energy = a_energy + 0.5 * jnp.einsum("if,if->i", x, x) + 0.5 * maxnorm ** 2
    return energy, attn


if __name__ == "__main__":
    key = jax.random.PRNGKey(0)
    kx, ka, kx2, ka2 = jax.random.split(key, 4)

    # Case 1: small shapes consistent with the module (single grid step).
    N, F, M, BETA = 8, 32, 16, 4.0
    x = jax.random.normal(kx, (N, F), dtype=jnp.float32)
    a = jax.random.normal(ka, (M, F), dtype=jnp.float32)
    ref_energy, ref_attn = _reference(x, a, BETA, normalize=True)

    energy, attn = hopfield_energy(x, a, BETA, normalize=True, return_attn=True)
    energy = jax.block_until_ready(energy)
    attn = jax.block_until_ready(attn)
    assert jnp.allclose(energy, ref_energy, atol=1e-5, rtol=1e-5)
    assert jnp.allclose(attn, ref_attn, atol=1e-5, rtol=1e-5)

    energy_only = jax.block_until_ready(
        hopfield_energy(x, a, BETA, normalize=True, return_attn=False))
    assert jnp.allclose(energy_only, ref_energy, atol=1e-5, rtol=1e-5)

    # Case 2: exercises the (N, M) grid + online logsumexp accumulator (2x2 grid).
    N2, F2, M2, BETA2 = 32, 128, 256, 2.0
    x2 = jax.random.normal(kx2, (N2, F2), dtype=jnp.float32)
    a2 = jax.random.normal(ka2, (M2, F2), dtype=jnp.float32)
    ref_energy2, ref_attn2 = _reference(x2, a2, BETA2, normalize=True)

    energy2, attn2 = hopfield_energy(x2, a2, BETA2, normalize=True,
                                     return_attn=True, tile_n=16, tile_m=128)
    energy2 = jax.block_until_ready(energy2)
    attn2 = jax.block_until_ready(attn2)
    assert jnp.allclose(energy2, ref_energy2, atol=1e-5, rtol=1e-5)
    assert jnp.allclose(attn2, ref_attn2, atol=1e-5, rtol=1e-5)

    energy2_only = jax.block_until_ready(
        hopfield_energy(x2, a2, BETA2, normalize=True, return_attn=False,
                        tile_n=16, tile_m=128))
    assert jnp.allclose(energy2_only, ref_energy2, atol=1e-5, rtol=1e-5)

    print("KERNEL_OK")
</pallas_src>

<mosaic_0001>
module attributes {stable_mosaic.version = 11 : i64} {
  func.func @kernel(%arg0: i32, %arg1: i32, %arg2: memref<8x32xf32, #tpu.memory_space<vmem>>, %arg3: memref<32x16xf32, #tpu.memory_space<vmem>>, %arg4: memref<8x1xf32, #tpu.memory_space<vmem>>, %arg5: memref<8x16xf32, #tpu.memory_space<vmem>>, %arg6: memref<8x1xf32, #tpu.memory_space<vmem>>, %arg7: memref<8x1xf32, #tpu.memory_space<vmem>>) attributes {dimension_semantics = [#tpu.dimension_semantics<parallel>, #tpu.dimension_semantics<arbitrary>], iteration_bounds = array<i64: 1, 1>, scalar_prefetch = 0 : i64, scratch_operands = 2 : i64, tpu.core_type = #tpu.core_type<tc>, window_params = [{transform_indices = @transform_0, window_bounds = array<i64: 8, 32>}, {transform_indices = @transform_1, window_bounds = array<i64: 32, 16>}, {transform_indices = @transform_2, window_bounds = array<i64: 8, 1>}, {transform_indices = @transform_3, window_bounds = array<i64: 8, 16>}]} {
    %c0_i32 = arith.constant 0 : i32
    %0 = arith.cmpi eq, %arg1, %c0_i32 : i32
    %1 = arith.extui %0 : i1 to i32
    %c0_i32_0 = arith.constant 0 : i32
    %2 = arith.cmpi ne, %1, %c0_i32_0 : i32
    scf.if %2 {
      %cst_21 = arith.constant 0xFF800000 : f32
      %29 = vector.broadcast %cst_21 : f32 to vector<8x1xf32>
      %c0_22 = arith.constant 0 : index
      %c0_23 = arith.constant 0 : index
      %30 = vector.load %arg6[%c0_22, %c0_23] : memref<8x1xf32, #tpu.memory_space<vmem>>, vector<8x1xf32>
      tpu.vector_store %arg6[%c0_22, %c0_23], %29 {strides = array<i32>} : memref<8x1xf32, #tpu.memory_space<vmem>>, vector<8x1xf32>,
      %cst_24 = arith.constant 0.000000e+00 : f32
      %31 = vector.broadcast %cst_24 : f32 to vector<8x1xf32>
      %c0_25 = arith.constant 0 : index
      %c0_26 = arith.constant 0 : index
      %32 = vector.load %arg7[%c0_25, %c0_26] : memref<8x1xf32, #tpu.memory_space<vmem>>, vector<8x1xf32>
      tpu.vector_store %arg7[%c0_25, %c0_26], %31 {strides = array<i32>} : memref<8x1xf32, #tpu.memory_space<vmem>>, vector<8x1xf32>,
    } else {
    }
    %c0 = arith.constant 0 : index
    %c0_1 = arith.constant 0 : index
    %3 = vector.load %arg2[%c0, %c0_1] : memref<8x32xf32, #tpu.memory_space<vmem>>, vector<8x32xf32>
    %c0_2 = arith.constant 0 : index
    %c0_3 = arith.constant 0 : index
    %4 = vector.load %arg3[%c0_2, %c0_3] : memref<32x16xf32, #tpu.memory_space<vmem>>, vector<32x16xf32>
    %cst = arith.constant dense<0.000000e+00> : vector<8x16xf32>
    %5 = tpu.matmul %3, %4, %cst {dimension_numbers = #tpu.dot_dimension_numbers<[1], [0], [0], [1], [0, 0, 1, 1], [], []>} : vector<8x32xf32>, vector<32x16xf32>, vector<8x16xf32> -> vector<8x16xf32>
    %c0_4 = arith.constant 0 : index
    %c0_5 = arith.constant 0 : index
    %6 = vector.load %arg5[%c0_4, %c0_5] : memref<8x16xf32, #tpu.memory_space<vmem>>, vector<8x16xf32>
    tpu.vector_store %arg5[%c0_4, %c0_5], %5 {strides = array<i32>} : memref<8x16xf32, #tpu.memory_space<vmem>>, vector<8x16xf32>,
    %cst_6 = arith.constant 4.000000e+00 : f32
    %7 = vector.broadcast %cst_6 : f32 to vector<8x16xf32>
    %8 = arith.mulf %7, %5 : vector<8x16xf32>
    %c0_7 = arith.constant 0 : index
    %c0_8 = arith.constant 0 : index
    %9 = vector.load %arg6[%c0_7, %c0_8] : memref<8x1xf32, #tpu.memory_space<vmem>>, vector<8x1xf32>
    %cst_9 = arith.constant dense<0xFF800000> : vector<8xf32>
    %10 = vector.multi_reduction <maximumf>, %8, %cst_9 [1] : vector<8x16xf32> to vector<8xf32>
    %11 = vector.shape_cast %10 : vector<8xf32> to vector<8x1xf32>
    %12 = arith.maximumf %9, %11 : vector<8x1xf32>
    %c0_10 = arith.constant 0 : index
    %c0_11 = arith.constant 0 : index
    %13 = vector.load %arg6[%c0_10, %c0_11] : memref<8x1xf32, #tpu.memory_space<vmem>>, vector<8x1xf32>
    %14 = arith.subf %13, %12 : vector<8x1xf32>
    %15 = math.exp %14 : vector<8x1xf32>
    %c0_12 = arith.constant 0 : index
    %c0_13 = arith.constant 0 : index
    %16 = vector.load %arg7[%c0_12, %c0_13] : memref<8x1xf32, #tpu.memory_space<vmem>>, vector<8x1xf32>
    %17 = arith.mulf %15, %16 : vector<8x1xf32>
    %18 = vector.broadcast %12 : vector<8x1xf32> to vector<8x16xf32>
    %19 = arith.subf %8, %18 : vector<8x16xf32>
    %20 = math.exp %19 : vector<8x16xf32>
    %cst_14 = arith.constant dense<0.000000e+00> : vector<8xf32>
    %21 = vector.multi_reduction <add>, %20, %cst_14 [1] : vector<8x16xf32> to vector<8xf32>
    %22 = vector.shape_cast %21 : vector<8xf32> to vector<8x1xf32>
    %23 = arith.addf %17, %22 : vector<8x1xf32>
    %c0_15 = arith.constant 0 : index
    %c0_16 = arith.constant 0 : index
    %24 = vector.load %arg7[%c0_15, %c0_16] : memref<8x1xf32, #tpu.memory_space<vmem>>, vector<8x1xf32>
    tpu.vector_store %arg7[%c0_15, %c0_16], %23 {strides = array<i32>} : memref<8x1xf32, #tpu.memory_space<vmem>>, vector<8x1xf32>,
    %c0_17 = arith.constant 0 : index
    %c0_18 = arith.constant 0 : index
    %25 = vector.load %arg6[%c0_17, %c0_18] : memref<8x1xf32, #tpu.memory_space<vmem>>, vector<8x1xf32>
    tpu.vector_store %arg6[%c0_17, %c0_18], %12 {strides = array<i32>} : memref<8x1xf32, #tpu.memory_space<vmem>>, vector<8x1xf32>,
    %c0_i32_19 = arith.constant 0 : i32
    %26 = arith.cmpi eq, %arg1, %c0_i32_19 : i32
    %27 = arith.extui %26 : i1 to i32
    %c0_i32_20 = arith.constant 0 : i32
    %28 = arith.cmpi ne, %27, %c0_i32_20 : i32
    scf.if %28 {
      %c0_21 = arith.constant 0 : index
      %c0_22 = arith.constant 0 : index
      %29 = vector.load %arg6[%c0_21, %c0_22] : memref<8x1xf32, #tpu.memory_space<vmem>>, vector<8x1xf32>
      %c0_23 = arith.constant 0 : index
      %c0_24 = arith.constant 0 : index
      %30 = vector.load %arg7[%c0_23, %c0_24] : memref<8x1xf32, #tpu.memory_space<vmem>>, vector<8x1xf32>
      %31 = math.log %30 : vector<8x1xf32>
      %32 = arith.addf %29, %31 : vector<8x1xf32>
      %cst_25 = arith.constant 2.77258873 : f32
      %33 = vector.broadcast %cst_25 : f32 to vector<8x1xf32>
      %34 = arith.subf %32, %33 : vector<8x1xf32>
      %cst_26 = arith.constant 0.000000e+00 : f32
      %35 = vector.broadcast %cst_26 : f32 to vector<8x1xf32>
      %36 = arith.subf %35, %34 : vector<8x1xf32>
      %cst_27 = arith.constant 4.000000e+00 : f32
      %37 = vector.broadcast %cst_27 : f32 to vector<8x1xf32>
      %38 = arith.divf %36, %37 : vector<8x1xf32>
      %c0_28 = arith.constant 0 : index
      %c0_29 = arith.constant 0 : index
      %39 = vector.load %arg4[%c0_28, %c0_29] : memref<8x1xf32, #tpu.memory_space<vmem>>, vector<8x1xf32>
      tpu.vector_store %arg4[%c0_28, %c0_29], %38 {strides = array<i32>} : memref<8x1xf32, #tpu.memory_space<vmem>>, vector<8x1xf32>,
    } else {
    }
    return
  }
  func.func @transform_0(%arg0: i32, %arg1: i32) -> (i32, i32) {
    %c0_i32 = arith.constant 0 : i32
    %c0_i32_0 = arith.constant 0 : i32
    return %arg0, %c0_i32 : i32, i32
  }
  func.func @transform_1(%arg0: i32, %arg1: i32) -> (i32, i32) {
    %c0_i32 = arith.constant 0 : i32
    %c0_i32_0 = arith.constant 0 : i32
    return %c0_i32, %arg1 : i32, i32
  }
  func.func @transform_2(%arg0: i32, %arg1: i32) -> (i32, i32) {
    %c0_i32 = arith.constant 0 : i32
    %c0_i32_0 = arith.constant 0 : i32
    return %arg0, %c0_i32 : i32, i32
  }
  func.func @transform_3(%arg0: i32, %arg1: i32) -> (i32, i32) {
    %c0_i32 = arith.constant 0 : i32
    return %arg0, %arg1 : i32, i32
  }
}

</mosaic_0001>

<llo_original>
// kernel: tpu_custom_call.1
$region0: #{tpu_custom_call.1}
  #allocation0 [shape = 'u32[]', space=smem, size = 0x4, offset = 0x4, fixed_abs, tag = 'smem constant byte address 0x4 - core index']
  #allocation1 [shape = 'u32[144,128]{1,0:T(1,128)}', space=vmem, size = 0x12000, scoped, tag = 'internal scratch']
  #allocation2 [shape = 'f32[8,1]{1,0:T(8,128)}', space=vmem, size = 0x1000, scoped, tag = 'scratch operand']
  #allocation3 [shape = 'f32[8,1]{1,0:T(8,128)}', space=vmem, size = 0x1000, scoped, tag = 'scratch operand']
  %s0 = inlined_call_operand.vmem [shape: f32[8,32], index: 0, kind: input, shape index: {}]
  %s1 = inlined_call_operand.vmem [shape: f32[32,16], index: 1, kind: input, shape index: {}]
  %s2 = inlined_call_operand.vmem [shape: f32[8,1], index: 2, kind: output, shape index: {0}]
  %s3 = inlined_call_operand.hbm [shape: f32[8,16], index: 3, kind: output, shape index: {1}]
  %4 = xla_tuple %s2, %s3
  %s5 = sld [smem:[#allocation0]]
  $region34: #{tpu_custom_call.1} parent=0
    _
  %s7 = ssub.s32 1, %s5
  %s8 = scalar_select 0, %s7, %s5
  $region1: #{tpu_custom_call.1} parent=0
    #allocation4 [shape = 'u8[4096]{0}', space=vmem, size = 0x1000, scoped, tag = 'output window, operand 1, single buffered']
    #allocation5 [shape = 's32[1]{0}', space=sflag, size = 0x4, scoped, tag = 'scoped memory for tpu_custom_call.1']
    %9 = vsyncpa [#allocation5], 0
    // Predicated region
    $region2: #{tpu_custom_call.1} parent=1 // pred_check
      _
    $region3: #{tpu_custom_call.1} parent=1 // pred_check_branch
      %11 = sbr.rel (0) target = $region5
    $region4: #{tpu_custom_call.1} parent=1 // pred_region
      _
    $region5: #{tpu_custom_call.1} parent=1 // pred_fallthru
      _
    // Predicated region
    $region6: #{tpu_custom_call.1} parent=1 // pred_check
      _
    $region7: #{tpu_custom_call.1} parent=1 // pred_check_branch
      %13 = sbr.rel (0) target = $region9
    $region8: #{tpu_custom_call.1} parent=1 // pred_region
      _
    $region9: #{tpu_custom_call.1} parent=1 // pred_fallthru
      _
    %p14 = scmp.eq.s32.totalorder 0, 0
    // Predicated region
    $region10: #{tpu_custom_call.1} parent=1 // pred_check
      %p15 = pneg %p14
    $region11: #{tpu_custom_call.1} parent=1 // pred_check_branch
      %17 = sbr.rel (%p15) target = $region13
    $region12: #{tpu_custom_call.1} parent=1 // pred_region
      %vm18 = vcmask 7168
      %19 = vst.msk [vmem:[#allocation2] sm:$0xff] %vm18, -inf
      %20 = vst.msk [vmem:[#allocation3] sm:$0xff] %vm18, 0.0
    $region13: #{tpu_custom_call.1} parent=1 // pred_fallthru
      _
    %v21 = vld [vmem:[%s0] sm:$0xff]
    %v22 = vld [vmem:[%s1] sm:$0xff]
    %v23 = vld [vmem:[%s1 + $0x8] sm:$0xff]
    %v24 = vld [vmem:[%s1 + $0x10] sm:$0xff]
    %v25 = vld [vmem:[%s1 + $0x18] sm:$0xff]
    %vm26 = vcmask 261120
    %v28 = vsel %vm26, %v21, 0
    %30 = vmatprep.subr.mxu0 0.0
    %31 = vmatpush1.msra.mxu0 %v22
    %32 = vmatprep.subr.mxu0 0.0
    %33 = vmatpush1.msra.mxu0 %v23
    %34 = vmatprep.subr.mxu0 0.0
    %35 = vmatpush1.msra.mxu0 %v24
    %36 = vmatprep.subr.mxu0 0.0
    %37 = vmatpush1.msra.mxu0 %v25
    %38 = vmatprep.subr.mxu0 0.0
    %39 = vmatpush1.msra.mxu0 0.0
    %40 = vmatprep.subr.mxu0 0.0
    %41 = vmatpush1.msra.mxu0 0.0
    %42 = vmatprep.subr.mxu0 0.0
    %43 = vmatpush1.msra.mxu0 0.0
    %44 = vmatprep.subr.mxu0 0.0
    %45 = vmatpush1.msra.mxu0 0.0
    %46 = vmatprep.subr.mxu0 0.0
    %47 = vmatpush1.msra.mxu0 0.0
    %48 = vmatprep.subr.mxu0 0.0
    %49 = vmatpush1.msra.mxu0 0.0
    %50 = vmatprep.subr.mxu0 0.0
    %51 = vmatpush1.msra.mxu0 0.0
    %52 = vmatprep.subr.mxu0 0.0
    %53 = vmatpush1.msra.mxu0 0.0
    %54 = vmatprep.subr.mxu0 0.0
    %55 = vmatpush1.msra.mxu0 0.0
    %56 = vmatprep.subr.mxu0 0.0
    %57 = vmatpush1.msra.mxu0 0.0
    %58 = vmatprep.subr.mxu0 0.0
    %59 = vmatpush1.msra.mxu0 0.0
    %60 = vmatprep.subr.mxu0 0.0
    %61 = vmatpush1.msra.mxu0 0.0
    %62 = vmatprep.subr.mxu0 0.0
    %63 = vmatpush1.msra.mxu0 0.0
    %64 = vmatprep.subr.mxu0 0.0
    %65 = vmatpush1.msra.mxu0 0.0
    %66 = vmatprep.subr.mxu0 0.0
    %67 = vmatpush1.msra.mxu0 0.0
    %68 = vmatprep.subr.mxu0 0.0
    %69 = vmatpush1.msra.mxu0 0.0
    %70 = vmatprep.subr.mxu0 0.0
    %71 = vmatpush1.msra.mxu0 0.0
    %72 = vmatprep.subr.mxu0 0.0
    %73 = vmatpush1.msra.mxu0 0.0
    %74 = vmatprep.subr.mxu0 0.0
    %75 = vmatpush1.msra.mxu0 0.0
    %76 = vmatprep.subr.mxu0 0.0
    %77 = vmatpush1.msra.mxu0 0.0
    %78 = vmatprep.subr.mxu0 0.0
    %79 = vmatpush1.msra.mxu0 0.0
    %80 = vmatprep.subr.mxu0 0.0
    %81 = vmatpush1.msra.mxu0 0.0
    %82 = vmatprep.subr.mxu0 0.0
    %83 = vmatpush1.msra.mxu0 0.0
    %84 = vmatprep.subr.mxu0 0.0
    %85 = vmatpush1.msra.mxu0 0.0
    %86 = vmatprep.subr.mxu0 0.0
    %87 = vmatpush1.msra.mxu0 0.0
    %88 = vmatprep.subr.mxu0 0.0
    %89 = vmatpush1.msra.mxu0 0.0
    %90 = vmatprep.subr.mxu0 0.0
    %91 = vmatpush1.msra.mxu0 0.0
    %92 = vmatprep.subr.mxu0 0.0
    %93 = vmatpush1.msra.mxu0 0.0
    %94 = vmatprep.mubr.f32.mxu0 0.0
    %95 = vmatmul.mubr.f32.gmra.mrb[0].mxu0 %v28
    %v96 = vpop.f32.mrb[0].mxu0
    %v97 = vadd.f32 0.0, %v96
    %v98 = vpop.f32.mrb[0].mxu0
    %99 = vdwg.mxu0
    %vm100 = vcmask 130048
    %101 = vst.msk [vmem:[#allocation4] sm:$0xff] %vm100, %v97
    %v102 = vmul.f32 %v97, 4.0
    %v103 = vld [vmem:[#allocation2] sm:$0xff]
    %v104 = vsel %vm100, %v102, -inf
    %105 = vmax.xlane.f32.xlu0 %v104
    %v106 = vpop.xlane.xlu0 %105
    %v107 = vmax.f32 %v103, %v106
    %v108 = vsub.f32 %v103, %v107
    %v109 = vmul.f32 %v108, 1.442695
    %v110 = vpow.pop %v109
    %v111 = vld [vmem:[#allocation3] sm:$0xff]
    %v112 = vmul.f32 %v110, %v111
    %114 = vset.pattern.permute.xlu0 0
    %115 = vperm.xlu0 %114, %v107
    %v116 = vpop.permute.xlu0 %115
    %v118 = vsub.f32 %v102, %v116
    %v119 = vmul.f32 %v118, 1.442695
    %v120 = vpow.pop %v119
    %v121 = vsel %vm100, %v120, 0.0
    %122 = vadd.xlane.f32.xlu0 %v121
    %v123 = vpop.xlane.xlu0 %122
    %v124 = vadd.f32 %v112, %v123
    %vm125 = vcmask 7168
    %126 = vst.msk [vmem:[#allocation3] sm:$0xff] %vm125, %v124
    %127 = vst.msk [vmem:[#allocation2] sm:$0xff] %vm125, %v107
    // Predicated region
    $region14: #{tpu_custom_call.1} parent=1 // pred_check
      %p128 = pneg %p14
    $region15: #{tpu_custom_call.1} parent=1 // pred_check_branch
      %130 = sbr.rel (%p128) target = $region17
    $region16: #{tpu_custom_call.1} parent=1 // pred_region
      %v131 = vld [vmem:[#allocation2] sm:$0xff]
      %v132 = vld [vmem:[#allocation3] sm:$0xff]
      %v133 = vlog2.pop %v132
      %v134 = vmul.f32 %v133, 0.6931472
      %v135 = vadd.f32 %v131, %v134
      %v136 = vsub.f32 %v135, 2.7725887
      %v137 = vsub.f32 0.0, %v136
      %v138 = vrcp.pop 4.0
      %v139 = vmul.f32 %v137, %v138
      %140 = vst.msk [vmem:[%s2] sm:$0xff] %vm125, %v139
    $region17: #{tpu_custom_call.1} parent=1 // pred_fallthru
      _
    // Predicated region
    $region18: #{tpu_custom_call.1} parent=1 // pred_check
      _
    $region19: #{tpu_custom_call.1} parent=1 // pred_check_branch
      %142 = sbr.rel (0) target = $region21
    $region20: #{tpu_custom_call.1} parent=1 // pred_region
      _
    $region21: #{tpu_custom_call.1} parent=1 // pred_fallthru
      _
    // Predicated region
    $region22: #{tpu_custom_call.1} parent=1 // pred_check
      _
    $region23: #{tpu_custom_call.1} parent=1 // pred_check_branch
      %144 = sbr.rel (0) target = $region25
    $region24: #{tpu_custom_call.1} parent=1 // pred_region
      %s146 = ssub.s32 128, 128
      %147 = vsyncadd [#allocation5], %s146
      %s149 = sshll.u32 [#allocation4], 4
      %s150 = int_to_ptr.vmem [resolvable:$true] %s149
      %152 = dma.vmem_to_hbm [thread:$0]  %s150, 128, %s3, [#allocation5]
    $region25: #{tpu_custom_call.1} parent=1 // pred_fallthru
      _
    // Predicated region
    $region26: #{tpu_custom_call.1} parent=1 // pred_check
      _
    $region27: #{tpu_custom_call.1} parent=1 // pred_check_branch
      %154 = sbr.rel (0) target = $region29
    $region28: #{tpu_custom_call.1} parent=1 // pred_region
      _
    $region29: #{tpu_custom_call.1} parent=1 // pred_fallthru
      _
    // Predicated region
    $region30: #{tpu_custom_call.1} parent=1 // pred_check
      _
    $region31: #{tpu_custom_call.1} parent=1 // pred_check_branch
      %156 = sbr.rel (0) target = $region33
    $region32: #{tpu_custom_call.1} parent=1 // pred_region
      %157 = dma.done [#allocation5], 128
    $region33: #{tpu_custom_call.1} parent=1 // pred_fallthru
      _
    %158 = vsyncpa [#allocation5], 1

</llo_original>
